<compile_context>
chip_gen: v7x
topology: tpu7x:2x2x1
jax: 0.10.0
libtpu: 0.0.40
codegen_flags: <defaults>
</compile_context>

<pallas_src>
import jax
import jax.numpy as jnp
from jax.experimental import pallas as pl
from jax.experimental.pallas import tpu as pltpu


def _multiple_rule_kernel(x_ref, sw_ref, wor_ref, o_ref):
    # x:   (TB, D)  f32
    # sw:  (D, 2)   pre-softmaxed conjunction weights, already transposed
    # wor: (2, R)   pre-softmaxed OR weights, already transposed
    x = x_ref[...]

    # Conjunction stage: y = relu(x @ softmax(w12).T)  -> (TB, 2)   [MXU]
    y = jnp.maximum(
        jnp.dot(x, sw_ref[...], preferred_element_type=jnp.float32), 0.0)

    # OR stage: out = cat([y1,y2],1) @ softmax(w_or).T  -> (TB, R)  [MXU]
    out = jnp.dot(y, wor_ref[...], preferred_element_type=jnp.float32)

    # Final ReLU of the module is mathematically a no-op (softmax >= 0, y >= 0);
    # kept for exact parity — single VPU max, free under slack.
    o_ref[...] = jnp.maximum(out, 0.0).astype(o_ref.dtype)


def multiple_rule_layer(x, w1, w2, w_or, *, block_b=4096):
    """x: (B, D), w1/w2: (1, D), w_or: (R, 2). Returns (B, R) float32."""
    B, D = x.shape
    R = w_or.shape[0]

    # Tiny one-time glue in plain JAX: softmax the weights (matches the module,
    # which softmaxes at forward time) and transpose into matmul-ready layout.
    sw = jnp.transpose(jax.nn.softmax(jnp.concatenate([w1, w2], axis=0), axis=1))  # (D, 2)
    wor = jnp.transpose(jax.nn.softmax(w_or, axis=1))                              # (2, R)

    if B <= block_b:
        # Small / mid batch: no grid, no pipeline — everything resident in VMEM.
        return pl.pallas_call(
            _multiple_rule_kernel,
            out_shape=jax.ShapeDtypeStruct((B, R), jnp.float32),
            in_specs=[
                pl.BlockSpec(memory_space=pltpu.MemorySpace.VMEM),
                pl.BlockSpec(memory_space=pltpu.MemorySpace.VMEM),
                pl.BlockSpec(memory_space=pltpu.MemorySpec.VMEM)
                if False else pl.BlockSpec(memory_space=pltpu.MemorySpace.VMEM),
            ],
            out_specs=pl.BlockSpec(memory_space=pltpu.MemorySpace.VMEM),
        )(x, sw, wor)

    # Large batch: tile over batch only (weights stay resident), partial last
    # block handled by Pallas masking — no pad / slice passes over HBM.
    grid = (pl.cdiv(B, block_b),)
    return pl.pallas_call(
        _multiple_rule_kernel,
        out_shape=jax.ShapeDtypeStruct((B, R), jnp.float32),
        grid=grid,
        in_specs=[
            pl.BlockSpec((block_b, D), lambda i: (i, 0)),
            pl.BlockSpec((D, 2), lambda i: (0, 0)),
            pl.BlockSpec((2, R), lambda i: (0, 0)),
        ],
        out_specs=pl.BlockSpec((block_b, R), lambda i: (i, 0)),
        compiler_params=pltpu.CompilerParams(
            dimension_semantics=("parallel",)),
    )(x, sw, wor)


def _reference(x, w1, w2, w_or):
    s1 = jax.nn.softmax(w1, axis=1)
    s2 = jax.nn.softmax(w2, axis=1)
    y1 = jax.nn.relu(x @ s1.T)
    y2 = jax.nn.relu(x @ s2.T)
    ri = jnp.concatenate([y1, y2], axis=1)
    so = jax.nn.softmax(w_or, axis=1)
    return jax.nn.relu(ri @ so.T)


if __name__ == "__main__":
    key = jax.random.PRNGKey(0)
    kx, k1, k2, k3, kxl = jax.random.split(key, 5)

    # Small shapes consistent with the module: batch=8, in_size=16, rule_number=4.
    B, D, R = 8, 16, 4
    x = jax.random.normal(kx, (B, D), dtype=jnp.float32)
    # nn.init.normal_(mean=0.5, std=0.1) equivalents:
    w1 = 0.5 + 0.1 * jax.random.normal(k1, (1, D), dtype=jnp.float32)
    w2 = 0.5 + 0.1 * jax.random.normal(k2, (1, D), dtype=jnp.float32)
    w_or = 0.5 + 0.1 * jax.random.normal(k3, (R, 2), dtype=jnp.float32)

    out = jax.block_until_ready(multiple_rule_layer(x, w1, w2, w_or))
    ref = _reference(x, w1, w2, w_or)
    assert out.shape == (B, R)
    assert jnp.allclose(out, ref, atol=1e-5, rtol=1e-5), "small-batch mismatch"

    # Exercise the batch-tiled (grid) path with a ragged batch and small tile.
    BL = 1000
    xl = jax.random.normal(kxl, (BL, D), dtype=jnp.float32)
    out_l = jax.block_until_ready(
        multiple_rule_layer(xl, w1, w2, w_or, block_b=256))
    ref_l = _reference(xl, w1, w2, w_or)
    assert out_l.shape == (BL, R)
    assert jnp.allclose(out_l, ref_l, atol=1e-5, rtol=1e-5), "tiled-batch mismatch"

    print("KERNEL_OK")
</pallas_src>

<mosaic_0001>
module attributes {stable_mosaic.version = 11 : i64} {
  func.func @_multiple_rule_kernel(%arg0: memref<8x16xf32, #tpu.memory_space<vmem>>, %arg1: memref<16x2xf32, #tpu.memory_space<vmem>>, %arg2: memref<2x4xf32, #tpu.memory_space<vmem>>, %arg3: memref<8x4xf32, #tpu.memory_space<vmem>>) attributes {dimension_semantics = [], scalar_prefetch = 0 : i64, scratch_operands = 0 : i64, tpu.core_type = #tpu.core_type<tc>} {
    %c0 = arith.constant 0 : index
    %c0_0 = arith.constant 0 : index
    %0 = vector.load %arg0[%c0, %c0_0] : memref<8x16xf32, #tpu.memory_space<vmem>>, vector<8x16xf32>
    %c0_1 = arith.constant 0 : index
    %c0_2 = arith.constant 0 : index
    %1 = vector.load %arg1[%c0_1, %c0_2] : memref<16x2xf32, #tpu.memory_space<vmem>>, vector<16x2xf32>
    %cst = arith.constant dense<0.000000e+00> : vector<8x2xf32>
    %2 = tpu.matmul %0, %1, %cst {dimension_numbers = #tpu.dot_dimension_numbers<[1], [0], [0], [1], [0, 0, 1, 1], [], []>} : vector<8x16xf32>, vector<16x2xf32>, vector<8x2xf32> -> vector<8x2xf32>
    %cst_3 = arith.constant 0.000000e+00 : f32
    %3 = vector.broadcast %cst_3 : f32 to vector<8x2xf32>
    %4 = arith.maximumf %2, %3 : vector<8x2xf32>
    %c0_4 = arith.constant 0 : index
    %c0_5 = arith.constant 0 : index
    %5 = vector.load %arg2[%c0_4, %c0_5] : memref<2x4xf32, #tpu.memory_space<vmem>>, vector<2x4xf32>
    %cst_6 = arith.constant dense<0.000000e+00> : vector<8x4xf32>
    %6 = tpu.matmul %4, %5, %cst_6 {dimension_numbers = #tpu.dot_dimension_numbers<[1], [0], [0], [1], [0, 0, 1, 1], [], []>} : vector<8x2xf32>, vector<2x4xf32>, vector<8x4xf32> -> vector<8x4xf32>
    %cst_7 = arith.constant 0.000000e+00 : f32
    %7 = vector.broadcast %cst_7 : f32 to vector<8x4xf32>
    %8 = arith.maximumf %6, %7 : vector<8x4xf32>
    %c0_8 = arith.constant 0 : index
    %c0_9 = arith.constant 0 : index
    %9 = vector.load %arg3[%c0_8, %c0_9] : memref<8x4xf32, #tpu.memory_space<vmem>>, vector<8x4xf32>
    tpu.vector_store %arg3[%c0_8, %c0_9], %8 {strides = array<i32>} : memref<8x4xf32, #tpu.memory_space<vmem>>, vector<8x4xf32>,
    return
  }
}

</mosaic_0001>

<llo_original>
// kernel: tpu_custom_call.1
$region0: #{tpu_custom_call.1}
  #allocation0 [shape = 'u32[]', space=smem, size = 0x4, offset = 0x4, fixed_abs, tag = 'smem constant byte address 0x4 - core index']
  #allocation1 [shape = 'u32[144,128]{1,0:T(1,128)}', space=vmem, size = 0x12000, scoped, tag = 'internal scratch']
  %s0 = inlined_call_operand.vmem [shape: f32[8,16], index: 0, kind: input, shape index: {}]
  %s1 = inlined_call_operand.vmem [shape: f32[16,2], index: 1, kind: input, shape index: {}]
  %s2 = inlined_call_operand.vmem [shape: f32[2,4], index: 2, kind: input, shape index: {}]
  %s3 = inlined_call_operand.vmem [shape: f32[8,4], index: 3, kind: output, shape index: {}]
  %s4 = sld [smem:[#allocation0]]
  $region22: #{tpu_custom_call.1} parent=0
    _
  %s6 = ssub.s32 1, %s4
  %s7 = scalar_select 0, %s6, %s4
  // Predicated region
  $region2: #{tpu_custom_call.1} parent=0 // pred_check
    _
  $region3: #{tpu_custom_call.1} parent=0 // pred_check_branch
    %9 = sbr.rel (0) target = $region5
  $region4: #{tpu_custom_call.1} parent=0 // pred_region
    _
  $region5: #{tpu_custom_call.1} parent=0 // pred_fallthru
    _
  // Predicated region
  $region6: #{tpu_custom_call.1} parent=0 // pred_check
    _
  $region7: #{tpu_custom_call.1} parent=0 // pred_check_branch
    %11 = sbr.rel (0) target = $region9
  $region8: #{tpu_custom_call.1} parent=0 // pred_region
    _
  $region9: #{tpu_custom_call.1} parent=0 // pred_fallthru
    _
  // Predicated region
  $region10: #{tpu_custom_call.1} parent=0 // pred_check
    _
  $region11: #{tpu_custom_call.1} parent=0 // pred_check_branch
    %13 = sbr.rel (0) target = $region13
  $region12: #{tpu_custom_call.1} parent=0 // pred_region
    _
  $region13: #{tpu_custom_call.1} parent=0 // pred_fallthru
    _
  %v14 = vld [vmem:[%s0] sm:$0xff]
  %v15 = vld [vmem:[%s1] sm:$0xff]
  %v16 = vld [vmem:[%s1 + $0x8] sm:$0xff]
  %vm17 = vcmask 130048
  %v19 = vsel %vm17, %v14, 0
  %21 = vmatprep.subr.mxu0 0.0
  %22 = vmatpush1.msra.mxu0 %v15
  %23 = vmatprep.subr.mxu0 0.0
  %24 = vmatpush1.msra.mxu0 %v16
  %25 = vmatprep.subr.mxu0 0.0
  %26 = vmatpush1.msra.mxu0 0.0
  %27 = vmatprep.subr.mxu0 0.0
  %28 = vmatpush1.msra.mxu0 0.0
  %29 = vmatprep.subr.mxu0 0.0
  %30 = vmatpush1.msra.mxu0 0.0
  %31 = vmatprep.subr.mxu0 0.0
  %32 = vmatpush1.msra.mxu0 0.0
  %33 = vmatprep.subr.mxu0 0.0
  %34 = vmatpush1.msra.mxu0 0.0
  %35 = vmatprep.subr.mxu0 0.0
  %36 = vmatpush1.msra.mxu0 0.0
  %37 = vmatprep.subr.mxu0 0.0
  %38 = vmatpush1.msra.mxu0 0.0
  %39 = vmatprep.subr.mxu0 0.0
  %40 = vmatpush1.msra.mxu0 0.0
  %41 = vmatprep.subr.mxu0 0.0
  %42 = vmatpush1.msra.mxu0 0.0
  %43 = vmatprep.subr.mxu0 0.0
  %44 = vmatpush1.msra.mxu0 0.0
  %45 = vmatprep.subr.mxu0 0.0
  %46 = vmatpush1.msra.mxu0 0.0
  %47 = vmatprep.subr.mxu0 0.0
  %48 = vmatpush1.msra.mxu0 0.0
  %49 = vmatprep.subr.mxu0 0.0
  %50 = vmatpush1.msra.mxu0 0.0
  %51 = vmatprep.subr.mxu0 0.0
  %52 = vmatpush1.msra.mxu0 0.0
  %53 = vmatprep.subr.mxu0 0.0
  %54 = vmatpush1.msra.mxu0 0.0
  %55 = vmatprep.subr.mxu0 0.0
  %56 = vmatpush1.msra.mxu0 0.0
  %57 = vmatprep.subr.mxu0 0.0
  %58 = vmatpush1.msra.mxu0 0.0
  %59 = vmatprep.subr.mxu0 0.0
  %60 = vmatpush1.msra.mxu0 0.0
  %61 = vmatprep.subr.mxu0 0.0
  %62 = vmatpush1.msra.mxu0 0.0
  %63 = vmatprep.subr.mxu0 0.0
  %64 = vmatpush1.msra.mxu0 0.0
  %65 = vmatprep.subr.mxu0 0.0
  %66 = vmatpush1.msra.mxu0 0.0
  %67 = vmatprep.subr.mxu0 0.0
  %68 = vmatpush1.msra.mxu0 0.0
  %69 = vmatprep.subr.mxu0 0.0
  %70 = vmatpush1.msra.mxu0 0.0
  %71 = vmatprep.subr.mxu0 0.0
  %72 = vmatpush1.msra.mxu0 0.0
  %73 = vmatprep.subr.mxu0 0.0
  %74 = vmatpush1.msra.mxu0 0.0
  %75 = vmatprep.subr.mxu0 0.0
  %76 = vmatpush1.msra.mxu0 0.0
  %77 = vmatprep.subr.mxu0 0.0
  %78 = vmatpush1.msra.mxu0 0.0
  %79 = vmatprep.subr.mxu0 0.0
  %80 = vmatpush1.msra.mxu0 0.0
  %81 = vmatprep.subr.mxu0 0.0
  %82 = vmatpush1.msra.mxu0 0.0
  %83 = vmatprep.subr.mxu0 0.0
  %84 = vmatpush1.msra.mxu0 0.0
  %85 = vmatprep.mubr.f32.mxu0 0.0
  %86 = vmatmul.mubr.f32.gmra.mrb[0].mxu0 %v19
  %v87 = vpop.f32.mrb[0].mxu0
  %v88 = vadd.f32 0.0, %v87
  %v89 = vpop.f32.mrb[0].mxu0
  %90 = vdwg.mxu0
  %v91 = vmax.f32 %v88, 0.0
  %v92 = vld [vmem:[%s2] sm:$0x3]
  %vm93 = vcmask 15360
  %v95 = vsel %vm93, %v91, 0
  %vm97 = vcmask 1041408
  %v99 = vsel %vm97, %v92, 0
  %101 = vmatprep.subr.mxu0 0.0
  %102 = vmatpush1.msra.mxu0 %v99
  %103 = vmatprep.subr.mxu0 0.0
  %104 = vmatpush1.msra.mxu0 0.0
  %105 = vmatprep.subr.mxu0 0.0
  %106 = vmatpush1.msra.mxu0 0.0
  %107 = vmatprep.subr.mxu0 0.0
  %108 = vmatpush1.msra.mxu0 0.0
  %109 = vmatprep.subr.mxu0 0.0
  %110 = vmatpush1.msra.mxu0 0.0
  %111 = vmatprep.subr.mxu0 0.0
  %112 = vmatpush1.msra.mxu0 0.0
  %113 = vmatprep.subr.mxu0 0.0
  %114 = vmatpush1.msra.mxu0 0.0
  %115 = vmatprep.subr.mxu0 0.0
  %116 = vmatpush1.msra.mxu0 0.0
  %117 = vmatprep.subr.mxu0 0.0
  %118 = vmatpush1.msra.mxu0 0.0
  %119 = vmatprep.subr.mxu0 0.0
  %120 = vmatpush1.msra.mxu0 0.0
  %121 = vmatprep.subr.mxu0 0.0
  %122 = vmatpush1.msra.mxu0 0.0
  %123 = vmatprep.subr.mxu0 0.0
  %124 = vmatpush1.msra.mxu0 0.0
  %125 = vmatprep.subr.mxu0 0.0
  %126 = vmatpush1.msra.mxu0 0.0
  %127 = vmatprep.subr.mxu0 0.0
  %128 = vmatpush1.msra.mxu0 0.0
  %129 = vmatprep.subr.mxu0 0.0
  %130 = vmatpush1.msra.mxu0 0.0
  %131 = vmatprep.subr.mxu0 0.0
  %132 = vmatpush1.msra.mxu0 0.0
  %133 = vmatprep.subr.mxu0 0.0
  %134 = vmatpush1.msra.mxu0 0.0
  %135 = vmatprep.subr.mxu0 0.0
  %136 = vmatpush1.msra.mxu0 0.0
  %137 = vmatprep.subr.mxu0 0.0
  %138 = vmatpush1.msra.mxu0 0.0
  %139 = vmatprep.subr.mxu0 0.0
  %140 = vmatpush1.msra.mxu0 0.0
  %141 = vmatprep.subr.mxu0 0.0
  %142 = vmatpush1.msra.mxu0 0.0
  %143 = vmatprep.subr.mxu0 0.0
  %144 = vmatpush1.msra.mxu0 0.0
  %145 = vmatprep.subr.mxu0 0.0
  %146 = vmatpush1.msra.mxu0 0.0
  %147 = vmatprep.subr.mxu0 0.0
  %148 = vmatpush1.msra.mxu0 0.0
  %149 = vmatprep.subr.mxu0 0.0
  %150 = vmatpush1.msra.mxu0 0.0
  %151 = vmatprep.subr.mxu0 0.0
  %152 = vmatpush1.msra.mxu0 0.0
  %153 = vmatprep.subr.mxu0 0.0
  %154 = vmatpush1.msra.mxu0 0.0
  %155 = vmatprep.subr.mxu0 0.0
  %156 = vmatpush1.msra.mxu0 0.0
  %157 = vmatprep.subr.mxu0 0.0
  %158 = vmatpush1.msra.mxu0 0.0
  %159 = vmatprep.subr.mxu0 0.0
  %160 = vmatpush1.msra.mxu0 0.0
  %161 = vmatprep.subr.mxu0 0.0
  %162 = vmatpush1.msra.mxu0 0.0
  %163 = vmatprep.subr.mxu0 0.0
  %164 = vmatpush1.msra.mxu0 0.0
  %165 = vmatprep.mubr.f32.mxu0 0.0
  %166 = vmatmul.mubr.f32.gmra.mrb[0].mxu0 %v95
  %v167 = vpop.f32.mrb[0].mxu0
  %v168 = vadd.f32 0.0, %v167
  %v169 = vpop.f32.mrb[0].mxu0
  %170 = vdwg.mxu0
  %v171 = vmax.f32 %v168, 0.0
  %vm172 = vcmask 31744
  %173 = vst.msk [vmem:[%s3] sm:$0xff] %vm172, %v171
  // Predicated region
  $region14: #{tpu_custom_call.1} parent=0 // pred_check
    _
  $region15: #{tpu_custom_call.1} parent=0 // pred_check_branch
    %175 = sbr.rel (0) target = $region17
  $region16: #{tpu_custom_call.1} parent=0 // pred_region
    _
  $region17: #{tpu_custom_call.1} parent=0 // pred_fallthru
    _
  // Predicated region
  $region18: #{tpu_custom_call.1} parent=0 // pred_check
    _
  $region19: #{tpu_custom_call.1} parent=0 // pred_check_branch
    %177 = sbr.rel (0) target = $region21
  $region20: #{tpu_custom_call.1} parent=0 // pred_region
    _
  $region21: #{tpu_custom_call.1} parent=0 // pred_fallthru
    _

</llo_original>
